<compile_context>
chip_gen: v5e
topology: v5e:2x2
jax: 0.10.0
libtpu: 0.0.40
codegen_flags: <defaults>
</compile_context>

<pallas_src>
import functools

import jax
import jax.numpy as jnp
from jax.experimental import pallas as pl
from jax.experimental.pallas import tpu as pltpu

_EPS = 1e-5    # PyTorch BatchNorm1d default eps
_LANE = 128    # TPU lane width


def _round_up(x, m):
    return (x + m - 1) // m * m


# ------------------------------ kernel helpers -------------------------------

def _bn_train(h, gamma, beta, *, relu):
    """Train-mode BatchNorm over rows of (N*L, C): one-pass sum/sumsq stats, one apply."""
    inv_m = 1.0 / h.shape[0]
    s1 = jnp.sum(h, axis=0, keepdims=True)
    s2 = jnp.sum(h * h, axis=0, keepdims=True)
    mean = s1 * inv_m
    var = jnp.maximum(s2 * inv_m - mean * mean, 0.0)      # biased var, like PyTorch
    scale = jax.lax.rsqrt(var + _EPS) * gamma             # EUP rsqrt; =0 on padded lanes
    shift = beta - mean * scale
    out = h * scale + shift
    return jnp.maximum(out, 0.0) if relu else out


def _conv_im2col(a, w_ref, mxu_dtype, K, c_dense, rk, lpos, L):
    """'same' 1-D conv as ONE MXU matmul.

    a      : (N*L, cp) f32 activation, real channels in lanes [0, c_dense), zeros elsewhere
    w_ref  : (rk, cp_out) packed weight ref; row t*c_dense + c  <->  torch W[co, c, t]
    The im2col lhs is built in-register: tap t = row-shift by (t - K//2) within each sample
    (pltpu.roll on the sublane axis + boundary mask), then a lane rotate places its real
    channels at lane group t.  All non-real lanes are zero, so the K tap copies sum into
    disjoint lane groups with no masked narrow stores.
    (Assumes N*L is a multiple of 8 for clean sublane rotates; true for the shapes below.)
    """
    M, cp = a.shape
    p = K // 2
    if rk > cp:
        a = jnp.pad(a, ((0, 0), (0, rk - cp)))
    cols = None
    for t in range(K):
        d = t - p                                          # source row offset of this tap
        at = a
        if d != 0:
            at = pltpu.roll(at, shift=(-d) % M, axis=0)    # rows: at[r] = a[r + d] (wrap masked)
            at = jnp.where((lpos + d >= 0) & (lpos + d < L), at, 0.0)
        if t * c_dense:
            at = pltpu.roll(at, shift=t * c_dense, axis=1)  # lanes: [0,c) -> [t*c, t*c + c)
        cols = at if cols is None else cols + at
    return jnp.dot(cols.astype(mxu_dtype), w_ref[...],
                   preferred_element_type=jnp.float32)


# ----------------------------------- kernel -----------------------------------

def resblock_kernel(x1_ref,
                    w1_ref, g1_ref, b1_ref,
                    w2_ref, g2_ref, b2_ref,
                    w3_ref, g3_ref, b3_ref,
                    ws_ref, gs_ref, bs_ref,
                    o_ref,
                    *, L, c_out, ksizes, rks, mxu_dtype):
    M = o_ref.shape[0]                      # N*L rows
    _, k2, k3 = ksizes
    _, rk2, rk3 = rks

    # per-row position inside its sample (hoisted; reused by both in-kernel im2cols)
    lpos = jax.lax.broadcasted_iota(jnp.int32, (M, 1), 0) % L

    # conv1 (im2col pre-packed in the wrapper) -> BN -> ReLU
    h = jnp.dot(x1_ref[...], w1_ref[...], preferred_element_type=jnp.float32)
    h = _bn_train(h, g1_ref[...], b1_ref[...], relu=True)

    # conv2 -> BN -> ReLU
    h = _conv_im2col(h, w2_ref, mxu_dtype, k2, c_out, rk2, lpos, L)
    h = _bn_train(h, g2_ref[...], b2_ref[...], relu=True)

    # conv3 -> BN
    h = _conv_im2col(h, w3_ref, mxu_dtype, k3, c_out, rk3, lpos, L)
    h = _bn_train(h, g3_ref[...], b3_ref[...], relu=False)

    # skip: 1x1 conv -> BN.  Reuses conv1's im2col lhs (re-read from VMEM here so it is not
    # kept live across the main path); the 1x1 weights sit in the centre-tap rows of ws.
    s = jnp.dot(x1_ref[...], ws_ref[...], preferred_element_type=jnp.float32)
    s = _bn_train(s, gs_ref[...], bs_ref[...], relu=False)

    # fused residual add + final ReLU: single lane-dense full-tile store
    o_ref[...] = jnp.maximum(h + s, 0.0)


# ----------------------------------- wrapper -----------------------------------

def residual_block(x_ncl, params, ksizes=(9, 5, 3), mxu_dtype=jnp.bfloat16):
    """x_ncl: (N, C_in, L) like PyTorch; returns (N, C_out, L)."""
    N, c_in, L = x_ncl.shape
    c_out = params["conv1_w"].shape[0]
    k1, k2, k3 = ksizes
    assert all(k % 2 == 1 for k in ksizes), "odd 'same' kernel sizes assumed (module default)"
    cp_out = _round_up(c_out, _LANE)
    rk1 = _round_up(k1 * c_in, _LANE)       # densely packed contraction widths
    rk2 = _round_up(k2 * c_out, _LANE)
    rk3 = _round_up(k3 * c_out, _LANE)
    p1 = k1 // 2
    M = N * L

    # ---- im2col for conv1 (and the 1x1 skip) built once in XLA, bf16, lane-dense --------
    x_nlc = jnp.transpose(x_ncl, (0, 2, 1)).astype(jnp.float32)             # (N, L, Cin)
    x_pad = jnp.pad(x_nlc, ((0, 0), (p1, p1), (0, 0)))
    cols1 = jnp.concatenate([x_pad[:, t:t + L, :] for t in range(k1)], axis=-1)
    im2col1 = jnp.pad(cols1.reshape(M, k1 * c_in),
                      ((0, 0), (0, rk1 - k1 * c_in))).astype(mxu_dtype)     # (M, rk1)

    # ---- weight packing: torch (Cout, Csrc, K) -> (rk, Cout_p), row = t*Csrc + c --------
    def pack_conv(name, rk):
        w = params[name].astype(jnp.float32)
        co, cs, K = w.shape
        wt = jnp.transpose(w, (2, 1, 0)).reshape(K * cs, co)                # row = t*cs + c
        return jnp.pad(wt, ((0, rk - K * cs), (0, cp_out - co))).astype(mxu_dtype)

    def pack_skip(name):   # 1x1 weights -> centre-tap rows of conv1's im2col lhs
        w = params[name].astype(jnp.float32)[:, :, 0]                       # (Cout, Cin)
        off = p1 * c_in
        return jnp.pad(w.T, ((off, rk1 - off - c_in),
                             (0, cp_out - c_out))).astype(mxu_dtype)

    def vec(name):         # (C,) -> (1, Cout_p); zero padding keeps padded lanes exactly 0
        return jnp.pad(params[name].astype(jnp.float32),
                       (0, cp_out - c_out)).reshape(1, cp_out)

    # NOTE: conv biases intentionally NOT passed -- each conv feeds a train-mode BatchNorm
    # whose mean subtraction cancels a per-channel additive bias exactly.
    args = [
        im2col1,
        pack_conv("conv1_w", rk1), vec("norm1_g"), vec("norm1_b"),
        pack_conv("conv2_w", rk2), vec("norm2_g"), vec("norm2_b"),
        pack_conv("conv3_w", rk3), vec("norm3_g"), vec("norm3_b"),
        pack_skip("conv_skip_w"), vec("norm_skip_g"), vec("norm_skip_b"),
    ]

    # ---- per-generation VMEM budget ------------------------------------------------------
    itemsize = jnp.dtype(mxu_dtype).itemsize
    est_bytes = (M * rk1 * itemsize                               # im2col1
                 + (2 * rk1 + rk2 + rk3) * cp_out * itemsize      # packed weights
                 + 8 * cp_out * 4                                 # BN vectors
                 + M * cp_out * 4                                 # output
                 + 6 * M * max(rk1, rk2, rk3) * 4)                # live f32 temporaries
    try:
        vmem_cap = int(getattr(pltpu.get_tpu_info(), "vmem_capacity_bytes", 64 * 2 ** 20))
    except Exception:
        vmem_cap = 64 * 2 ** 20                                   # conservative (v7x)
    vmem_limit = int(min(max(2 * est_bytes, 32 * 2 ** 20), vmem_cap - 8 * 2 ** 20))

    out2d = pl.pallas_call(
        functools.partial(resblock_kernel, L=L, c_out=c_out, ksizes=tuple(ksizes),
                          rks=(rk1, rk2, rk3), mxu_dtype=mxu_dtype),
        out_shape=jax.ShapeDtypeStruct((M, cp_out), jnp.float32),
        in_specs=[pl.BlockSpec(memory_space=pltpu.MemorySpace.VMEM)] * len(args),
        out_specs=pl.BlockSpec(memory_space=pltpu.MemorySpace.VMEM),
        compiler_params=pltpu.CompilerParams(vmem_limit_bytes=vmem_limit),
    )(*args)

    out = out2d.reshape(N, L, cp_out)[:, :, :c_out]
    # TODO(synk): if the consumer can take channels-last (N, L, Cout), return `out` directly
    # and drop this extra XLA transpose pass over HBM.
    return jnp.transpose(out, (0, 2, 1))                           # PyTorch (N, Cout, L)


# -------------------------- pure-JAX reference check ---------------------------

def ref_forward(x, params, ksizes=(9, 5, 3)):
    def conv(h, w, b, k):
        p = k // 2
        hp = jnp.pad(h, ((0, 0), (0, 0), (p, p)))
        o = jax.lax.conv_general_dilated(hp, w, (1,), "VALID",
                                         dimension_numbers=("NCH", "OIH", "NCH"))
        return o + b[None, :, None]

    def bn(h, g, b):
        m = jnp.mean(h, axis=(0, 2), keepdims=True)
        v = jnp.mean(jnp.square(h - m), axis=(0, 2), keepdims=True)
        return (h - m) / jnp.sqrt(v + _EPS) * g[None, :, None] + b[None, :, None]

    h = jax.nn.relu(bn(conv(x, params["conv1_w"], params["conv1_b"], ksizes[0]),
                       params["norm1_g"], params["norm1_b"]))
    h = jax.nn.relu(bn(conv(h, params["conv2_w"], params["conv2_b"], ksizes[1]),
                       params["norm2_g"], params["norm2_b"]))
    h = bn(conv(h, params["conv3_w"], params["conv3_b"], ksizes[2]),
           params["norm3_g"], params["norm3_b"])
    s = bn(conv(x, params["conv_skip_w"], params["conv_skip_b"], 1),
           params["norm_skip_g"], params["norm_skip_b"])
    return jax.nn.relu(h + s)


# ------------------------------ deterministic init ------------------------------

def init_params(key, c_in, c_out, ksizes):
    params = {}
    specs = [("conv1", c_in, ksizes[0]), ("conv2", c_out, ksizes[1]),
             ("conv3", c_out, ksizes[2]), ("conv_skip", c_in, 1)]
    for name, ci, k in specs:
        key, kw, kb = jax.random.split(key, 3)
        bound = 1.0 / float(ci * k) ** 0.5
        params[name + "_w"] = jax.random.uniform(kw, (c_out, ci, k), jnp.float32, -bound, bound)
        params[name + "_b"] = jax.random.uniform(kb, (c_out,), jnp.float32, -bound, bound)
    for name in ("norm1", "norm2", "norm3", "norm_skip"):
        key, kg, kb = jax.random.split(key, 3)
        # PyTorch init is gamma=1, beta=0; perturb deterministically to exercise the affine path.
        params[name + "_g"] = jnp.ones((c_out,), jnp.float32) + 0.1 * jax.random.normal(kg, (c_out,))
        params[name + "_b"] = 0.1 * jax.random.normal(kb, (c_out,))
    return params
    # TODO(synk): BatchNorm running-mean/var momentum buffer updates (train-mode side effect)
    # are stateful bookkeeping that does not affect the returned tensor; omitted.


if __name__ == "__main__":
    key = jax.random.PRNGKey(0)
    k_params, k_x = jax.random.split(key)
    N, C_IN, C_OUT, L = 2, 4, 8, 16
    KSIZES = (9, 5, 3)

    params = init_params(k_params, C_IN, C_OUT, KSIZES)
    x = jax.random.normal(k_x, (N, C_IN, L), jnp.float32)   # PyTorch layout (N, C, L)

    ref = ref_forward(x, params, KSIZES)

    # structural check with f32 MXU operands (tight tolerance)
    out_f32 = jax.block_until_ready(residual_block(x, params, KSIZES, mxu_dtype=jnp.float32))
    assert out_f32.shape == (N, C_OUT, L), out_f32.shape
    err32 = float(jnp.max(jnp.abs(out_f32 - ref)))
    assert err32 < 5e-3, f"f32-path mismatch vs reference: max abs err = {err32}"

    # production path: bf16 MXU operands, f32 accumulation (looser tolerance for bf16 rounding)
    out = jax.block_until_ready(residual_block(x, params, KSIZES))
    assert out.shape == (N, C_OUT, L), out.shape
    err = float(jnp.max(jnp.abs(out - ref)))
    assert err < 5e-2, f"bf16-path mismatch vs reference: max abs err = {err}"

    print("KERNEL_OK")
</pallas_src>

<mosaic_0001>
module attributes {stable_mosaic.version = 11 : i64} {
  func.func @resblock_kernel(%arg0: memref<32x128xf32, #tpu.memory_space<vmem>>, %arg1: memref<128x128xf32, #tpu.memory_space<vmem>>, %arg2: memref<1x128xf32, #tpu.memory_space<vmem>>, %arg3: memref<1x128xf32, #tpu.memory_space<vmem>>, %arg4: memref<128x128xf32, #tpu.memory_space<vmem>>, %arg5: memref<1x128xf32, #tpu.memory_space<vmem>>, %arg6: memref<1x128xf32, #tpu.memory_space<vmem>>, %arg7: memref<128x128xf32, #tpu.memory_space<vmem>>, %arg8: memref<1x128xf32, #tpu.memory_space<vmem>>, %arg9: memref<1x128xf32, #tpu.memory_space<vmem>>, %arg10: memref<128x128xf32, #tpu.memory_space<vmem>>, %arg11: memref<1x128xf32, #tpu.memory_space<vmem>>, %arg12: memref<1x128xf32, #tpu.memory_space<vmem>>, %arg13: memref<32x128xf32, #tpu.memory_space<vmem>>) attributes {dimension_semantics = [], scalar_prefetch = 0 : i64, scratch_operands = 0 : i64, tpu.core_type = #tpu.core_type<tc>} {
    %0 = tpu.iota {dimensions = array<i32: 0>} : vector<32x1xi32>
    %c16_i32 = arith.constant 16 : i32
    %c0_i32 = arith.constant 0 : i32
    %1 = arith.cmpi eq, %c16_i32, %c0_i32 : i32
    %c1_i32 = arith.constant 1 : i32
    %2 = arith.select %1, %c1_i32, %c16_i32 : i32
    %3 = vector.broadcast %2 : i32 to vector<32x1xi32>
    %4 = arith.remsi %0, %3 : vector<32x1xi32>
    %c0_i32_0 = arith.constant 0 : i32
    %5 = vector.broadcast %c0_i32_0 : i32 to vector<32x1xi32>
    %6 = arith.cmpi ne, %4, %5 : vector<32x1xi32>
    %c0_i32_1 = arith.constant 0 : i32
    %7 = vector.broadcast %c0_i32_1 : i32 to vector<32x1xi32>
    %8 = arith.cmpi slt, %4, %7 : vector<32x1xi32>
    %c0_i32_2 = arith.constant 0 : i32
    %9 = arith.cmpi slt, %2, %c0_i32_2 : i32
    %10 = vector.broadcast %9 : i1 to vector<32x1xi1>
    %11 = vector.broadcast %10 : vector<32x1xi1> to vector<32x1xi1>
    %12 = arith.xori %8, %11 : vector<32x1xi1>
    %13 = arith.andi %12, %6 : vector<32x1xi1>
    %14 = vector.broadcast %2 : i32 to vector<32x1xi32>
    %15 = arith.addi %4, %14 : vector<32x1xi32>
    %16 = arith.select %13, %15, %4 : vector<32x1xi1>, vector<32x1xi32>
    %c0 = arith.constant 0 : index
    %c0_3 = arith.constant 0 : index
    %17 = vector.load %arg0[%c0, %c0_3] : memref<32x128xf32, #tpu.memory_space<vmem>>, vector<32x128xf32>
    %c0_4 = arith.constant 0 : index
    %c0_5 = arith.constant 0 : index
    %18 = vector.load %arg1[%c0_4, %c0_5] : memref<128x128xf32, #tpu.memory_space<vmem>>, vector<128x128xf32>
    %cst = arith.constant dense<0.000000e+00> : vector<32x128xf32>
    %19 = tpu.matmul %17, %18, %cst {dimension_numbers = #tpu.dot_dimension_numbers<[1], [0], [0], [1], [0, 0, 1, 1], [], []>} : vector<32x128xf32>, vector<128x128xf32>, vector<32x128xf32> -> vector<32x128xf32>
    %c0_6 = arith.constant 0 : index
    %c0_7 = arith.constant 0 : index
    %20 = vector.load %arg2[%c0_6, %c0_7] : memref<1x128xf32, #tpu.memory_space<vmem>>, vector<1x128xf32>
    %c0_8 = arith.constant 0 : index
    %c0_9 = arith.constant 0 : index
    %21 = vector.load %arg3[%c0_8, %c0_9] : memref<1x128xf32, #tpu.memory_space<vmem>>, vector<1x128xf32>
    %cst_10 = arith.constant dense<0.000000e+00> : vector<128xf32>
    %22 = vector.multi_reduction <add>, %19, %cst_10 [0] : vector<32x128xf32> to vector<128xf32>
    %23 = vector.shape_cast %22 : vector<128xf32> to vector<1x128xf32>
    %24 = arith.mulf %19, %19 : vector<32x128xf32>
    %cst_11 = arith.constant dense<0.000000e+00> : vector<128xf32>
    %25 = vector.multi_reduction <add>, %24, %cst_11 [0] : vector<32x128xf32> to vector<128xf32>
    %26 = vector.shape_cast %25 : vector<128xf32> to vector<1x128xf32>
    %cst_12 = arith.constant 3.125000e-02 : f32
    %27 = vector.broadcast %cst_12 : f32 to vector<1x128xf32>
    %28 = arith.mulf %23, %27 : vector<1x128xf32>
    %cst_13 = arith.constant 3.125000e-02 : f32
    %29 = vector.broadcast %cst_13 : f32 to vector<1x128xf32>
    %30 = arith.mulf %26, %29 : vector<1x128xf32>
    %31 = arith.mulf %28, %28 : vector<1x128xf32>
    %32 = arith.subf %30, %31 : vector<1x128xf32>
    %cst_14 = arith.constant 0.000000e+00 : f32
    %33 = vector.broadcast %cst_14 : f32 to vector<1x128xf32>
    %34 = arith.maximumf %32, %33 : vector<1x128xf32>
    %cst_15 = arith.constant 9.99999974E-6 : f32
    %35 = vector.broadcast %cst_15 : f32 to vector<1x128xf32>
    %36 = arith.addf %34, %35 : vector<1x128xf32>
    %37 = math.rsqrt %36 : vector<1x128xf32>
    %38 = arith.mulf %37, %20 : vector<1x128xf32>
    %39 = arith.mulf %28, %38 : vector<1x128xf32>
    %40 = arith.subf %21, %39 : vector<1x128xf32>
    %41 = vector.broadcast %38 : vector<1x128xf32> to vector<32x128xf32>
    %42 = arith.mulf %19, %41 : vector<32x128xf32>
    %43 = vector.broadcast %40 : vector<1x128xf32> to vector<32x128xf32>
    %44 = arith.addf %42, %43 : vector<32x128xf32>
    %cst_16 = arith.constant 0.000000e+00 : f32
    %45 = vector.broadcast %cst_16 : f32 to vector<32x128xf32>
    %46 = arith.maximumf %44, %45 : vector<32x128xf32>
    %c2_i32 = arith.constant 2 : i32
    %47 = tpu.dynamic_rotate %46 by %c2_i32 dim 0 : vector<32x128xf32>, i32 -> vector<32x128xf32>
    %c-2_i32 = arith.constant -2 : i32
    %48 = vector.broadcast %c-2_i32 : i32 to vector<32x1xi32>
    %49 = arith.addi %16, %48 : vector<32x1xi32>
    %c0_i32_17 = arith.constant 0 : i32
    %50 = vector.broadcast %c0_i32_17 : i32 to vector<32x1xi32>
    %51 = arith.cmpi sge, %49, %50 : vector<32x1xi32>
    %c-2_i32_18 = arith.constant -2 : i32
    %52 = vector.broadcast %c-2_i32_18 : i32 to vector<32x1xi32>
    %53 = arith.addi %16, %52 : vector<32x1xi32>
    %c16_i32_19 = arith.constant 16 : i32
    %54 = vector.broadcast %c16_i32_19 : i32 to vector<32x1xi32>
    %55 = arith.cmpi slt, %53, %54 : vector<32x1xi32>
    %56 = arith.andi %51, %55 : vector<32x1xi1>
    %cst_20 = arith.constant 0.000000e+00 : f32
    %57 = vector.shape_cast %56 : vector<32x1xi1> to vector<32x1xi1>
    %58 = vector.broadcast %57 : vector<32x1xi1> to vector<32x128xi1>
    %59 = vector.broadcast %cst_20 : f32 to vector<32x128xf32>
    %60 = arith.select %58, %47, %59 : vector<32x128xi1>, vector<32x128xf32>
    %c1_i32_21 = arith.constant 1 : i32
    %61 = tpu.dynamic_rotate %46 by %c1_i32_21 dim 0 : vector<32x128xf32>, i32 -> vector<32x128xf32>
    %c-1_i32 = arith.constant -1 : i32
    %62 = vector.broadcast %c-1_i32 : i32 to vector<32x1xi32>
    %63 = arith.addi %16, %62 : vector<32x1xi32>
    %c0_i32_22 = arith.constant 0 : i32
    %64 = vector.broadcast %c0_i32_22 : i32 to vector<32x1xi32>
    %65 = arith.cmpi sge, %63, %64 : vector<32x1xi32>
    %c-1_i32_23 = arith.constant -1 : i32
    %66 = vector.broadcast %c-1_i32_23 : i32 to vector<32x1xi32>
    %67 = arith.addi %16, %66 : vector<32x1xi32>
    %c16_i32_24 = arith.constant 16 : i32
    %68 = vector.broadcast %c16_i32_24 : i32 to vector<32x1xi32>
    %69 = arith.cmpi slt, %67, %68 : vector<32x1xi32>
    %70 = arith.andi %65, %69 : vector<32x1xi1>
    %cst_25 = arith.constant 0.000000e+00 : f32
    %71 = vector.shape_cast %70 : vector<32x1xi1> to vector<32x1xi1>
    %72 = vector.broadcast %71 : vector<32x1xi1> to vector<32x128xi1>
    %73 = vector.broadcast %cst_25 : f32 to vector<32x128xf32>
    %74 = arith.select %72, %61, %73 : vector<32x128xi1>, vector<32x128xf32>
    %c8_i32 = arith.constant 8 : i32
    %75 = tpu.dynamic_rotate %74 by %c8_i32 dim 1 : vector<32x128xf32>, i32 -> vector<32x128xf32>
    %76 = arith.addf %60, %75 : vector<32x128xf32>
    %c16_i32_26 = arith.constant 16 : i32
    %77 = tpu.dynamic_rotate %46 by %c16_i32_26 dim 1 : vector<32x128xf32>, i32 -> vector<32x128xf32>
    %78 = arith.addf %76, %77 : vector<32x128xf32>
    %c31_i32 = arith.constant 31 : i32
    %79 = tpu.dynamic_rotate %46 by %c31_i32 dim 0 : vector<32x128xf32>, i32 -> vector<32x128xf32>
    %c1_i32_27 = arith.constant 1 : i32
    %80 = vector.broadcast %c1_i32_27 : i32 to vector<32x1xi32>
    %81 = arith.addi %16, %80 : vector<32x1xi32>
    %c0_i32_28 = arith.constant 0 : i32
    %82 = vector.broadcast %c0_i32_28 : i32 to vector<32x1xi32>
    %83 = arith.cmpi sge, %81, %82 : vector<32x1xi32>
    %c1_i32_29 = arith.constant 1 : i32
    %84 = vector.broadcast %c1_i32_29 : i32 to vector<32x1xi32>
    %85 = arith.addi %16, %84 : vector<32x1xi32>
    %c16_i32_30 = arith.constant 16 : i32
    %86 = vector.broadcast %c16_i32_30 : i32 to vector<32x1xi32>
    %87 = arith.cmpi slt, %85, %86 : vector<32x1xi32>
    %88 = arith.andi %83, %87 : vector<32x1xi1>
    %cst_31 = arith.constant 0.000000e+00 : f32
    %89 = vector.shape_cast %88 : vector<32x1xi1> to vector<32x1xi1>
    %90 = vector.broadcast %89 : vector<32x1xi1> to vector<32x128xi1>
    %91 = vector.broadcast %cst_31 : f32 to vector<32x128xf32>
    %92 = arith.select %90, %79, %91 : vector<32x128xi1>, vector<32x128xf32>
    %c24_i32 = arith.constant 24 : i32
    %93 = tpu.dynamic_rotate %92 by %c24_i32 dim 1 : vector<32x128xf32>, i32 -> vector<32x128xf32>
    %94 = arith.addf %78, %93 : vector<32x128xf32>
    %c30_i32 = arith.constant 30 : i32
    %95 = tpu.dynamic_rotate %46 by %c30_i32 dim 0 : vector<32x128xf32>, i32 -> vector<32x128xf32>
    %c2_i32_32 = arith.constant 2 : i32
    %96 = vector.broadcast %c2_i32_32 : i32 to vector<32x1xi32>
    %97 = arith.addi %16, %96 : vector<32x1xi32>
    %c0_i32_33 = arith.constant 0 : i32
    %98 = vector.broadcast %c0_i32_33 : i32 to vector<32x1xi32>
    %99 = arith.cmpi sge, %97, %98 : vector<32x1xi32>
    %c2_i32_34 = arith.constant 2 : i32
    %100 = vector.broadcast %c2_i32_34 : i32 to vector<32x1xi32>
    %101 = arith.addi %16, %100 : vector<32x1xi32>
    %c16_i32_35 = arith.constant 16 : i32
    %102 = vector.broadcast %c16_i32_35 : i32 to vector<32x1xi32>
    %103 = arith.cmpi slt, %101, %102 : vector<32x1xi32>
    %104 = arith.andi %99, %103 : vector<32x1xi1>
    %cst_36 = arith.constant 0.000000e+00 : f32
    %105 = vector.shape_cast %104 : vector<32x1xi1> to vector<32x1xi1>
    %106 = vector.broadcast %105 : vector<32x1xi1> to vector<32x128xi1>
    %107 = vector.broadcast %cst_36 : f32 to vector<32x128xf32>
    %108 = arith.select %106, %95, %107 : vector<32x128xi1>, vector<32x128xf32>
    %c32_i32 = arith.constant 32 : i32
    %109 = tpu.dynamic_rotate %108 by %c32_i32 dim 1 : vector<32x128xf32>, i32 -> vector<32x128xf32>
    %110 = arith.addf %94, %109 : vector<32x128xf32>
    %c0_37 = arith.constant 0 : index
    %c0_38 = arith.constant 0 : index
    %111 = vector.load %arg4[%c0_37, %c0_38] : memref<128x128xf32, #tpu.memory_space<vmem>>, vector<128x128xf32>
    %cst_39 = arith.constant dense<0.000000e+00> : vector<32x128xf32>
    %112 = tpu.matmul %110, %111, %cst_39 {dimension_numbers = #tpu.dot_dimension_numbers<[1], [0], [0], [1], [0, 0, 1, 1], [], []>} : vector<32x128xf32>, vector<128x128xf32>, vector<32x128xf32> -> vector<32x128xf32>
    %c0_40 = arith.constant 0 : index
    %c0_41 = arith.constant 0 : index
    %113 = vector.load %arg5[%c0_40, %c0_41] : memref<1x128xf32, #tpu.memory_space<vmem>>, vector<1x128xf32>
    %c0_42 = arith.constant 0 : index
    %c0_43 = arith.constant 0 : index
    %114 = vector.load %arg6[%c0_42, %c0_43] : memref<1x128xf32, #tpu.memory_space<vmem>>, vector<1x128xf32>
    %cst_44 = arith.constant dense<0.000000e+00> : vector<128xf32>
    %115 = vector.multi_reduction <add>, %112, %cst_44 [0] : vector<32x128xf32> to vector<128xf32>
    %116 = vector.shape_cast %115 : vector<128xf32> to vector<1x128xf32>
    %117 = arith.mulf %112, %112 : vector<32x128xf32>
    %cst_45 = arith.constant dense<0.000000e+00> : vector<128xf32>
    %118 = vector.multi_reduction <add>, %117, %cst_45 [0] : vector<32x128xf32> to vector<128xf32>
    %119 = vector.shape_cast %118 : vector<128xf32> to vector<1x128xf32>
    %cst_46 = arith.constant 3.125000e-02 : f32
    %120 = vector.broadcast %cst_46 : f32 to vector<1x128xf32>
    %121 = arith.mulf %116, %120 : vector<1x128xf32>
    %cst_47 = arith.constant 3.125000e-02 : f32
    %122 = vector.broadcast %cst_47 : f32 to vector<1x128xf32>
    %123 = arith.mulf %119, %122 : vector<1x128xf32>
    %124 = arith.mulf %121, %121 : vector<1x128xf32>
    %125 = arith.subf %123, %124 : vector<1x128xf32>
    %cst_48 = arith.constant 0.000000e+00 : f32
    %126 = vector.broadcast %cst_48 : f32 to vector<1x128xf32>
    %127 = arith.maximumf %125, %126 : vector<1x128xf32>
    %cst_49 = arith.constant 9.99999974E-6 : f32
    %128 = vector.broadcast %cst_49 : f32 to vector<1x128xf32>
    %129 = arith.addf %127, %128 : vector<1x128xf32>
    %130 = math.rsqrt %129 : vector<1x128xf32>
    %131 = arith.mulf %130, %113 : vector<1x128xf32>
    %132 = arith.mulf %121, %131 : vector<1x128xf32>
    %133 = arith.subf %114, %132 : vector<1x128xf32>
    %134 = vector.broadcast %131 : vector<1x128xf32> to vector<32x128xf32>
    %135 = arith.mulf %112, %134 : vector<32x128xf32>
    %136 = vector.broadcast %133 : vector<1x128xf32> to vector<32x128xf32>
    %137 = arith.addf %135, %136 : vector<32x128xf32>
    %cst_50 = arith.constant 0.000000e+00 : f32
    %138 = vector.broadcast %cst_50 : f32 to vector<32x128xf32>
    %139 = arith.maximumf %137, %138 : vector<32x128xf32>
    %c1_i32_51 = arith.constant 1 : i32
    %140 = tpu.dynamic_rotate %139 by %c1_i32_51 dim 0 : vector<32x128xf32>, i32 -> vector<32x128xf32>
    %c-1_i32_52 = arith.constant -1 : i32
    %141 = vector.broadcast %c-1_i32_52 : i32 to vector<32x1xi32>
    %142 = arith.addi %16, %141 : vector<32x1xi32>
    %c0_i32_53 = arith.constant 0 : i32
    %143 = vector.broadcast %c0_i32_53 : i32 to vector<32x1xi32>
    %144 = arith.cmpi sge, %142, %143 : vector<32x1xi32>
    %c-1_i32_54 = arith.constant -1 : i32
    %145 = vector.broadcast %c-1_i32_54 : i32 to vector<32x1xi32>
    %146 = arith.addi %16, %145 : vector<32x1xi32>
    %c16_i32_55 = arith.constant 16 : i32
    %147 = vector.broadcast %c16_i32_55 : i32 to vector<32x1xi32>
    %148 = arith.cmpi slt, %146, %147 : vector<32x1xi32>
    %149 = arith.andi %144, %148 : vector<32x1xi1>
    %cst_56 = arith.constant 0.000000e+00 : f32
    %150 = vector.shape_cast %149 : vector<32x1xi1> to vector<32x1xi1>
    %151 = vector.broadcast %150 : vector<32x1xi1> to vector<32x128xi1>
    %152 = vector.broadcast %cst_56 : f32 to vector<32x128xf32>
    %153 = arith.select %151, %140, %152 : vector<32x128xi1>, vector<32x128xf32>
    %c8_i32_57 = arith.constant 8 : i32
    %154 = tpu.dynamic_rotate %139 by %c8_i32_57 dim 1 : vector<32x128xf32>, i32 -> vector<32x128xf32>
    %155 = arith.addf %153, %154 : vector<32x128xf32>
    %c31_i32_58 = arith.constant 31 : i32
    %156 = tpu.dynamic_rotate %139 by %c31_i32_58 dim 0 : vector<32x128xf32>, i32 -> vector<32x128xf32>
    %c1_i32_59 = arith.constant 1 : i32
    %157 = vector.broadcast %c1_i32_59 : i32 to vector<32x1xi32>
    %158 = arith.addi %16, %157 : vector<32x1xi32>
    %c0_i32_60 = arith.constant 0 : i32
    %159 = vector.broadcast %c0_i32_60 : i32 to vector<32x1xi32>
    %160 = arith.cmpi sge, %158, %159 : vector<32x1xi32>
    %c1_i32_61 = arith.constant 1 : i32
    %161 = vector.broadcast %c1_i32_61 : i32 to vector<32x1xi32>
    %162 = arith.addi %16, %161 : vector<32x1xi32>
    %c16_i32_62 = arith.constant 16 : i32
    %163 = vector.broadcast %c16_i32_62 : i32 to vector<32x1xi32>
    %164 = arith.cmpi slt, %162, %163 : vector<32x1xi32>
    %165 = arith.andi %160, %164 : vector<32x1xi1>
    %cst_63 = arith.constant 0.000000e+00 : f32
    %166 = vector.shape_cast %165 : vector<32x1xi1> to vector<32x1xi1>
    %167 = vector.broadcast %166 : vector<32x1xi1> to vector<32x128xi1>
    %168 = vector.broadcast %cst_63 : f32 to vector<32x128xf32>
    %169 = arith.select %167, %156, %168 : vector<32x128xi1>, vector<32x128xf32>
    %c16_i32_64 = arith.constant 16 : i32
    %170 = tpu.dynamic_rotate %169 by %c16_i32_64 dim 1 : vector<32x128xf32>, i32 -> vector<32x128xf32>
    %171 = arith.addf %155, %170 : vector<32x128xf32>
    %c0_65 = arith.constant 0 : index
    %c0_66 = arith.constant 0 : index
    %172 = vector.load %arg7[%c0_65, %c0_66] : memref<128x128xf32, #tpu.memory_space<vmem>>, vector<128x128xf32>
    %cst_67 = arith.constant dense<0.000000e+00> : vector<32x128xf32>
    %173 = tpu.matmul %171, %172, %cst_67 {dimension_numbers = #tpu.dot_dimension_numbers<[1], [0], [0], [1], [0, 0, 1, 1], [], []>} : vector<32x128xf32>, vector<128x128xf32>, vector<32x128xf32> -> vector<32x128xf32>
    %c0_68 = arith.constant 0 : index
    %c0_69 = arith.constant 0 : index
    %174 = vector.load %arg8[%c0_68, %c0_69] : memref<1x128xf32, #tpu.memory_space<vmem>>, vector<1x128xf32>
    %c0_70 = arith.constant 0 : index
    %c0_71 = arith.constant 0 : index
    %175 = vector.load %arg9[%c0_70, %c0_71] : memref<1x128xf32, #tpu.memory_space<vmem>>, vector<1x128xf32>
    %cst_72 = arith.constant dense<0.000000e+00> : vector<128xf32>
    %176 = vector.multi_reduction <add>, %173, %cst_72 [0] : vector<32x128xf32> to vector<128xf32>
    %177 = vector.shape_cast %176 : vector<128xf32> to vector<1x128xf32>
    %178 = arith.mulf %173, %173 : vector<32x128xf32>
    %cst_73 = arith.constant dense<0.000000e+00> : vector<128xf32>
    %179 = vector.multi_reduction <add>, %178, %cst_73 [0] : vector<32x128xf32> to vector<128xf32>
    %180 = vector.shape_cast %179 : vector<128xf32> to vector<1x128xf32>
    %cst_74 = arith.constant 3.125000e-02 : f32
    %181 = vector.broadcast %cst_74 : f32 to vector<1x128xf32>
    %182 = arith.mulf %177, %181 : vector<1x128xf32>
    %cst_75 = arith.constant 3.125000e-02 : f32
    %183 = vector.broadcast %cst_75 : f32 to vector<1x128xf32>
    %184 = arith.mulf %180, %183 : vector<1x128xf32>
    %185 = arith.mulf %182, %182 : vector<1x128xf32>
    %186 = arith.subf %184, %185 : vector<1x128xf32>
    %cst_76 = arith.constant 0.000000e+00 : f32
    %187 = vector.broadcast %cst_76 : f32 to vector<1x128xf32>
    %188 = arith.maximumf %186, %187 : vector<1x128xf32>
    %cst_77 = arith.constant 9.99999974E-6 : f32
    %189 = vector.broadcast %cst_77 : f32 to vector<1x128xf32>
    %190 = arith.addf %188, %189 : vector<1x128xf32>
    %191 = math.rsqrt %190 : vector<1x128xf32>
    %192 = arith.mulf %191, %174 : vector<1x128xf32>
    %193 = arith.mulf %182, %192 : vector<1x128xf32>
    %194 = arith.subf %175, %193 : vector<1x128xf32>
    %195 = vector.broadcast %192 : vector<1x128xf32> to vector<32x128xf32>
    %196 = arith.mulf %173, %195 : vector<32x128xf32>
    %197 = vector.broadcast %194 : vector<1x128xf32> to vector<32x128xf32>
    %198 = arith.addf %196, %197 : vector<32x128xf32>
    %c0_78 = arith.constant 0 : index
    %c0_79 = arith.constant 0 : index
    %199 = vector.load %arg0[%c0_78, %c0_79] : memref<32x128xf32, #tpu.memory_space<vmem>>, vector<32x128xf32>
    %c0_80 = arith.constant 0 : index
    %c0_81 = arith.constant 0 : index
    %200 = vector.load %arg10[%c0_80, %c0_81] : memref<128x128xf32, #tpu.memory_space<vmem>>, vector<128x128xf32>
    %cst_82 = arith.constant dense<0.000000e+00> : vector<32x128xf32>
    %201 = tpu.matmul %199, %200, %cst_82 {dimension_numbers = #tpu.dot_dimension_numbers<[1], [0], [0], [1], [0, 0, 1, 1], [], []>} : vector<32x128xf32>, vector<128x128xf32>, vector<32x128xf32> -> vector<32x128xf32>
    %c0_83 = arith.constant 0 : index
    %c0_84 = arith.constant 0 : index
    %202 = vector.load %arg11[%c0_83, %c0_84] : memref<1x128xf32, #tpu.memory_space<vmem>>, vector<1x128xf32>
    %c0_85 = arith.constant 0 : index
    %c0_86 = arith.constant 0 : index
    %203 = vector.load %arg12[%c0_85, %c0_86] : memref<1x128xf32, #tpu.memory_space<vmem>>, vector<1x128xf32>
    %cst_87 = arith.constant dense<0.000000e+00> : vector<128xf32>
    %204 = vector.multi_reduction <add>, %201, %cst_87 [0] : vector<32x128xf32> to vector<128xf32>
    %205 = vector.shape_cast %204 : vector<128xf32> to vector<1x128xf32>
    %206 = arith.mulf %201, %201 : vector<32x128xf32>
    %cst_88 = arith.constant dense<0.000000e+00> : vector<128xf32>
    %207 = vector.multi_reduction <add>, %206, %cst_88 [0] : vector<32x128xf32> to vector<128xf32>
    %208 = vector.shape_cast %207 : vector<128xf32> to vector<1x128xf32>
    %cst_89 = arith.constant 3.125000e-02 : f32
    %209 = vector.broadcast %cst_89 : f32 to vector<1x128xf32>
    %210 = arith.mulf %205, %209 : vector<1x128xf32>
    %cst_90 = arith.constant 3.125000e-02 : f32
    %211 = vector.broadcast %cst_90 : f32 to vector<1x128xf32>
    %212 = arith.mulf %208, %211 : vector<1x128xf32>
    %213 = arith.mulf %210, %210 : vector<1x128xf32>
    %214 = arith.subf %212, %213 : vector<1x128xf32>
    %cst_91 = arith.constant 0.000000e+00 : f32
    %215 = vector.broadcast %cst_91 : f32 to vector<1x128xf32>
    %216 = arith.maximumf %214, %215 : vector<1x128xf32>
    %cst_92 = arith.constant 9.99999974E-6 : f32
    %217 = vector.broadcast %cst_92 : f32 to vector<1x128xf32>
    %218 = arith.addf %216, %217 : vector<1x128xf32>
    %219 = math.rsqrt %218 : vector<1x128xf32>
    %220 = arith.mulf %219, %202 : vector<1x128xf32>
    %221 = arith.mulf %210, %220 : vector<1x128xf32>
    %222 = arith.subf %203, %221 : vector<1x128xf32>
    %223 = vector.broadcast %220 : vector<1x128xf32> to vector<32x128xf32>
    %224 = arith.mulf %201, %223 : vector<32x128xf32>
    %225 = vector.broadcast %222 : vector<1x128xf32> to vector<32x128xf32>
    %226 = arith.addf %224, %225 : vector<32x128xf32>
    %227 = arith.addf %198, %226 : vector<32x128xf32>
    %cst_93 = arith.constant 0.000000e+00 : f32
    %228 = vector.broadcast %cst_93 : f32 to vector<32x128xf32>
    %229 = arith.maximumf %227, %228 : vector<32x128xf32>
    %c0_94 = arith.constant 0 : index
    %c0_95 = arith.constant 0 : index
    %230 = vector.load %arg13[%c0_94, %c0_95] : memref<32x128xf32, #tpu.memory_space<vmem>>, vector<32x128xf32>
    tpu.vector_store %arg13[%c0_94, %c0_95], %229 {strides = array<i32>} : memref<32x128xf32, #tpu.memory_space<vmem>>, vector<32x128xf32>,
    return
  }
}

</mosaic_0001>

<llo_original>
// kernel: tpu_custom_call.1
$region0: #{tpu_custom_call.1}
  #allocation0 [shape = 'u32[]', space=smem, size = 0x4, offset = 0x4, fixed_abs, tag = 'smem constant byte address 0x4 - core index']
  #allocation1 [shape = 'u32[72,128]{1,0:T(1,128)}', space=vmem, size = 0x9000, scoped, tag = 'internal scratch']
  %s0 = inlined_call_operand.hbm [shape: f32[32,128], index: 0, kind: input, shape index: {}]
  %s1 = inlined_call_operand.hbm [shape: f32[128,128], index: 1, kind: input, shape index: {}]
  %s2 = inlined_call_operand.vmem [shape: f32[1,128], index: 2, kind: input, shape index: {}]
  %s3 = inlined_call_operand.vmem [shape: f32[1,128], index: 3, kind: input, shape index: {}]
  %s4 = inlined_call_operand.hbm [shape: f32[128,128], index: 4, kind: input, shape index: {}]
  %s5 = inlined_call_operand.vmem [shape: f32[1,128], index: 5, kind: input, shape index: {}]
  %s6 = inlined_call_operand.vmem [shape: f32[1,128], index: 6, kind: input, shape index: {}]
  %s7 = inlined_call_operand.hbm [shape: f32[128,128], index: 7, kind: input, shape index: {}]
  %s8 = inlined_call_operand.vmem [shape: f32[1,128], index: 8, kind: input, shape index: {}]
  %s9 = inlined_call_operand.vmem [shape: f32[1,128], index: 9, kind: input, shape index: {}]
  %s10 = inlined_call_operand.hbm [shape: f32[128,128], index: 10, kind: input, shape index: {}]
  %s11 = inlined_call_operand.vmem [shape: f32[1,128], index: 11, kind: input, shape index: {}]
  %s12 = inlined_call_operand.vmem [shape: f32[1,128], index: 12, kind: input, shape index: {}]
  %s13 = inlined_call_operand.hbm [shape: f32[32,128], index: 13, kind: output, shape index: {}]
  %s14 = sld [smem:[#allocation0]]
  $region82: #{tpu_custom_call.1} parent=0
    _
  %s16 = ssub.s32 1, %s14
  %s17 = scalar_select 0, %s16, %s14
  $region1: #{tpu_custom_call.1} parent=0
    #allocation2 [shape = 'u8[16384]{0}', space=vmem, size = 0x4000, scoped, tag = 'input window, operand 0, single buffered']
    #allocation3 [shape = 's32[1]{0}', space=sflag, size = 0x4, scoped, tag = 'scoped memory for tpu_custom_call.1']
    #allocation4 [shape = 's32[1]{0}', space=sflag, size = 0x4, scoped, tag = 'scoped memory for tpu_custom_call.1']
    #allocation5 [shape = 'u8[65536]{0}', space=vmem, size = 0x10000, scoped, tag = 'input window, operand 1, single buffered']
    #allocation6 [shape = 's32[1]{0}', space=sflag, size = 0x4, scoped, tag = 'scoped memory for tpu_custom_call.1']
    #allocation7 [shape = 'u8[65536]{0}', space=vmem, size = 0x10000, scoped, tag = 'input window, operand 4, single buffered']
    #allocation8 [shape = 'u8[65536]{0}', space=vmem, size = 0x10000, scoped, tag = 'input window, operand 7, single buffered']
    #allocation9 [shape = 's32[1]{0}', space=sflag, size = 0x4, scoped, tag = 'scoped memory for tpu_custom_call.1']
    #allocation10 [shape = 'u8[65536]{0}', space=vmem, size = 0x10000, scoped, tag = 'input window, operand 10, single buffered']
    #allocation11 [shape = 'u8[16384]{0}', space=vmem, size = 0x4000, scoped, tag = 'output window, operand 0, single buffered']
    %18 = vsyncpa [#allocation3], 0
    %19 = vsyncpa [#allocation6], 0
    %20 = vsyncpa [#allocation9], 0
    %21 = vsyncpa [#allocation4], 0
    // Predicated region
    $region2: #{tpu_custom_call.1} parent=1 // pred_check
      _
    $region3: #{tpu_custom_call.1} parent=1 // pred_check_branch
      %23 = sbr.rel (0) target = $region5
    $region4: #{tpu_custom_call.1} parent=1 // pred_region
      %25 = vsyncadd [#allocation3], 0
      %s26 = sshll.u32 %s0, 4
      %s27 = int_to_ptr.hbm [resolvable:$true] %s26
      %s28 = sshll.u32 [#allocation2], 4
      %s29 = int_to_ptr.vmem [resolvable:$true] %s28
      %34 = dma.hbm_to_vmem [thread:$0]  %s27, 512, %s29, [#allocation3], 128, 128, 8
    $region5: #{tpu_custom_call.1} parent=1 // pred_fallthru
      _
    // Predicated region
    $region6: #{tpu_custom_call.1} parent=1 // pred_check
      _
    $region7: #{tpu_custom_call.1} parent=1 // pred_check_branch
      %36 = sbr.rel (0) target = $region9
    $region8: #{tpu_custom_call.1} parent=1 // pred_region
      %38 = vsyncadd [#allocation6], 0
      %s39 = sshll.u32 %s1, 4
      %s40 = int_to_ptr.hbm [resolvable:$true] %s39
      %s41 = sshll.u32 [#allocation5], 4
      %s42 = int_to_ptr.vmem [resolvable:$true] %s41
      %47 = dma.hbm_to_vmem [thread:$0]  %s40, 2048, %s42, [#allocation6], 128, 128, 8
    $region9: #{tpu_custom_call.1} parent=1 // pred_fallthru
      _
    // Predicated region
    $region10: #{tpu_custom_call.1} parent=1 // pred_check
      _
    $region11: #{tpu_custom_call.1} parent=1 // pred_check_branch
      %49 = sbr.rel (0) target = $region13
    $region12: #{tpu_custom_call.1} parent=1 // pred_region
      _
    $region13: #{tpu_custom_call.1} parent=1 // pred_fallthru
      _
    // Predicated region
    $region14: #{tpu_custom_call.1} parent=1 // pred_check
      _
    $region15: #{tpu_custom_call.1} parent=1 // pred_check_branch
      %51 = sbr.rel (0) target = $region17
    $region16: #{tpu_custom_call.1} parent=1 // pred_region
      _
    $region17: #{tpu_custom_call.1} parent=1 // pred_fallthru
      _
    // Predicated region
    $region18: #{tpu_custom_call.1} parent=1 // pred_check
      _
    $region19: #{tpu_custom_call.1} parent=1 // pred_check_branch
      %53 = sbr.rel (0) target = $region21
    $region20: #{tpu_custom_call.1} parent=1 // pred_region
      %55 = vsyncadd [#allocation6], 0
      %s56 = sshll.u32 %s4, 4
      %s57 = int_to_ptr.hbm [resolvable:$true] %s56
      %s58 = sshll.u32 [#allocation7], 4
      %s59 = int_to_ptr.vmem [resolvable:$true] %s58
      %64 = dma.hbm_to_vmem [thread:$0]  %s57, 2048, %s59, [#allocation6], 128, 128, 8
    $region21: #{tpu_custom_call.1} parent=1 // pred_fallthru
      _
    // Predicated region
    $region22: #{tpu_custom_call.1} parent=1 // pred_check
      _
    $region23: #{tpu_custom_call.1} parent=1 // pred_check_branch
      %66 = sbr.rel (0) target = $region25
    $region24: #{tpu_custom_call.1} parent=1 // pred_region
      _
    $region25: #{tpu_custom_call.1} parent=1 // pred_fallthru
      _
    // Predicated region
    $region26: #{tpu_custom_call.1} parent=1 // pred_check
      _
    $region27: #{tpu_custom_call.1} parent=1 // pred_check_branch
      %68 = sbr.rel (0) target = $region29
    $region28: #{tpu_custom_call.1} parent=1 // pred_region
      _
    $region29: #{tpu_custom_call.1} parent=1 // pred_fallthru
      _
    // Predicated region
    $region30: #{tpu_custom_call.1} parent=1 // pred_check
      _
    $region31: #{tpu_custom_call.1} parent=1 // pred_check_branch
      %70 = sbr.rel (0) target = $region33
    $region32: #{tpu_custom_call.1} parent=1 // pred_region
      %72 = vsyncadd [#allocation9], 0
      %s73 = sshll.u32 %s7, 4
      %s74 = int_to_ptr.hbm [resolvable:$true] %s73
      %s75 = sshll.u32 [#allocation8], 4
      %s76 = int_to_ptr.vmem [resolvable:$true] %s75
      %81 = dma.hbm_to_vmem [thread:$0]  %s74, 2048, %s76, [#allocation9], 128, 128, 8
    $region33: #{tpu_custom_call.1} parent=1 // pred_fallthru
      _
    // Predicated region
    $region34: #{tpu_custom_call.1} parent=1 // pred_check
      _
    $region35: #{tpu_custom_call.1} parent=1 // pred_check_branch
      %83 = sbr.rel (0) target = $region37
    $region36: #{tpu_custom_call.1} parent=1 // pred_region
      _
    $region37: #{tpu_custom_call.1} parent=1 // pred_fallthru
      _
    // Predicated region
    $region38: #{tpu_custom_call.1} parent=1 // pred_check
      _
    $region39: #{tpu_custom_call.1} parent=1 // pred_check_branch
      %85 = sbr.rel (0) target = $region41
    $region40: #{tpu_custom_call.1} parent=1 // pred_region
      _
    $region41: #{tpu_custom_call.1} parent=1 // pred_fallthru
      _
    // Predicated region
    $region42: #{tpu_custom_call.1} parent=1 // pred_check
      _
    $region43: #{tpu_custom_call.1} parent=1 // pred_check_branch
      %87 = sbr.rel (0) target = $region45
    $region44: #{tpu_custom_call.1} parent=1 // pred_region
      %89 = vsyncadd [#allocation9], 0
      %s90 = sshll.u32 %s10, 4
      %s91 = int_to_ptr.hbm [resolvable:$true] %s90
      %s92 = sshll.u32 [#allocation10], 4
      %s93 = int_to_ptr.vmem [resolvable:$true] %s92
      %98 = dma.hbm_to_vmem [thread:$0]  %s91, 2048, %s93, [#allocation9], 128, 128, 8
    $region45: #{tpu_custom_call.1} parent=1 // pred_fallthru
      _
    // Predicated region
    $region46: #{tpu_custom_call.1} parent=1 // pred_check
      _
    $region47: #{tpu_custom_call.1} parent=1 // pred_check_branch
      %100 = sbr.rel (0) target = $region49
    $region48: #{tpu_custom_call.1} parent=1 // pred_region
      _
    $region49: #{tpu_custom_call.1} parent=1 // pred_fallthru
      _
    // Predicated region
    $region50: #{tpu_custom_call.1} parent=1 // pred_check
      _
    $region51: #{tpu_custom_call.1} parent=1 // pred_check_branch
      %102 = sbr.rel (0) target = $region53
    $region52: #{tpu_custom_call.1} parent=1 // pred_region
      _
    $region53: #{tpu_custom_call.1} parent=1 // pred_fallthru
      _
    // Predicated region
    $region54: #{tpu_custom_call.1} parent=1 // pred_check
      _
    $region55: #{tpu_custom_call.1} parent=1 // pred_check_branch
      %104 = sbr.rel (0) target = $region57
    $region56: #{tpu_custom_call.1} parent=1 // pred_region
      %106 = dma.done [#allocation3], 512
    $region57: #{tpu_custom_call.1} parent=1 // pred_fallthru
      _
    // Predicated region
    $region58: #{tpu_custom_call.1} parent=1 // pred_check
      _
    $region59: #{tpu_custom_call.1} parent=1 // pred_check_branch
      %108 = sbr.rel (0) target = $region61
    $region60: #{tpu_custom_call.1} parent=1 // pred_region
      %110 = dma.done [#allocation6], 2048
    $region61: #{tpu_custom_call.1} parent=1 // pred_fallthru
      _
    // Predicated region
    $region62: #{tpu_custom_call.1} parent=1 // pred_check
      _
    $region63: #{tpu_custom_call.1} parent=1 // pred_check_branch
      %112 = sbr.rel (0) target = $region65
    $region64: #{tpu_custom_call.1} parent=1 // pred_region
      %114 = dma.done [#allocation6], 2048
    $region65: #{tpu_custom_call.1} parent=1 // pred_fallthru
      _
    // Predicated region
    $region66: #{tpu_custom_call.1} parent=1 // pred_check
      _
    $region67: #{tpu_custom_call.1} parent=1 // pred_check_branch
      %116 = sbr.rel (0) target = $region69
    $region68: #{tpu_custom_call.1} parent=1 // pred_region
      %118 = dma.done [#allocation9], 2048
    $region69: #{tpu_custom_call.1} parent=1 // pred_fallthru
      _
    // Predicated region
    $region70: #{tpu_custom_call.1} parent=1 // pred_check
      _
    $region71: #{tpu_custom_call.1} parent=1 // pred_check_branch
      %120 = sbr.rel (0) target = $region73
    $region72: #{tpu_custom_call.1} parent=1 // pred_region
      %122 = dma.done [#allocation9], 2048
    $region73: #{tpu_custom_call.1} parent=1 // pred_fallthru
      _
    %v123 = vlaneseq
    %v124 = vshrl.u32 %v123, 7
    %v125 = vadd.s32 %v124, 8
    %v126 = vadd.s32 %v124, 16
    %v127 = vadd.s32 %v124, 24
    %vm128 = vcmp.lt.s32.totalorder %v124, 0
    %v129 = vsub.s32 0, %v124
    %v130 = vsel %vm128, %v129, %v124
    %v131 = vshrl.u32 %v130, 4
    %v132 = vand.u32 %v130, 15
    %v133 = vsub.s32 0, %v132
    %v134 = vsel %vm128, %v133, %v132
    %vm135 = vcmp.lt.s32.totalorder %v125, 0
    %v136 = vsub.s32 0, %v125
    %v137 = vsel %vm135, %v136, %v125
    %v138 = vshrl.u32 %v137, 4
    %v139 = vand.u32 %v137, 15
    %v140 = vsub.s32 0, %v139
    %v141 = vsel %vm135, %v140, %v139
    %vm142 = vcmp.lt.s32.totalorder %v126, 0
    %v143 = vsub.s32 0, %v126
    %v144 = vsel %vm142, %v143, %v126
    %v145 = vshrl.u32 %v144, 4
    %v146 = vand.u32 %v144, 15
    %v147 = vsub.s32 0, %v146
    %v148 = vsel %vm142, %v147, %v146
    %vm149 = vcmp.lt.s32.totalorder %v127, 0
    %v150 = vsub.s32 0, %v127
    %v151 = vsel %vm149, %v150, %v127
    %v152 = vshrl.u32 %v151, 4
    %v153 = vand.u32 %v151, 15
    %v154 = vsub.s32 0, %v153
    %v155 = vsel %vm149, %v154, %v153
    %vm156 = vcmp.ne.s32.totalorder %v134, 0
    %vm157 = vcmp.ne.s32.totalorder %v141, 0
    %vm158 = vcmp.ne.s32.totalorder %v148, 0
    %vm159 = vcmp.ne.s32.totalorder %v155, 0
    %vm160 = vcmp.lt.s32.totalorder %v134, 0
    %vm161 = vcmp.lt.s32.totalorder %v141, 0
    %vm162 = vcmp.lt.s32.totalorder %v148, 0
    %vm163 = vcmp.lt.s32.totalorder %v155, 0
    %vm164 = vmand %vm160, %vm156
    %vm165 = vmand %vm161, %vm157
    %vm166 = vmand %vm162, %vm158
    %vm167 = vmand %vm163, %vm159
    %v168 = vadd.s32 %v134, 16
    %v169 = vadd.s32 %v141, 16
    %v170 = vadd.s32 %v148, 16
    %v171 = vadd.s32 %v155, 16
    %v172 = vsel %vm164, %v168, %v134
    %v173 = vsel %vm165, %v169, %v141
    %v174 = vsel %vm166, %v170, %v148
    %v175 = vsel %vm167, %v171, %v155
    %v176 = vld [vmem:[#allocation2] sm:$0xff]
    %v177 = vld [vmem:[#allocation2 + $0x8] sm:$0xff]
    %v178 = vld [vmem:[#allocation2 + $0x10] sm:$0xff]
    %v179 = vld [vmem:[#allocation2 + $0x18] sm:$0xff]
    %v180 = vld [vmem:[#allocation5] sm:$0xff]
    %v181 = vld [vmem:[#allocation5 + $0x8] sm:$0xff]
    %v182 = vld [vmem:[#allocation5 + $0x10] sm:$0xff]
    %v183 = vld [vmem:[#allocation5 + $0x18] sm:$0xff]
    %v184 = vld [vmem:[#allocation5 + $0x20] sm:$0xff]
    %v185 = vld [vmem:[#allocation5 + $0x28] sm:$0xff]
    %v186 = vld [vmem:[#allocation5 + $0x30] sm:$0xff]
    %v187 = vld [vmem:[#allocation5 + $0x38] sm:$0xff]
    %v188 = vld [vmem:[#allocation5 + $0x40] sm:$0xff]
    %v189 = vld [vmem:[#allocation5 + $0x48] sm:$0xff]
    %v190 = vld [vmem:[#allocation5 + $0x50] sm:$0xff]
    %v191 = vld [vmem:[#allocation5 + $0x58] sm:$0xff]
    %v192 = vld [vmem:[#allocation5 + $0x60] sm:$0xff]
    %v193 = vld [vmem:[#allocation5 + $0x68] sm:$0xff]
    %v194 = vld [vmem:[#allocation5 + $0x70] sm:$0xff]
    %v195 = vld [vmem:[#allocation5 + $0x78] sm:$0xff]
    %196 = vmatpush.msra.mxu0 %v195
    %197 = vmatpush.msra.mxu0 %v194
    %198 = vmatpush.msra.mxu0 %v193
    %199 = vmatpush.msra.mxu0 %v192
    %200 = vmatpush.msra.mxu0 %v191
    %201 = vmatpush.msra.mxu0 %v190
    %202 = vmatpush.msra.mxu0 %v189
    %203 = vmatpush.msra.mxu0 %v188
    %204 = vmatpush.msra.mxu0 %v187
    %205 = vmatpush.msra.mxu0 %v186
    %206 = vmatpush.msra.mxu0 %v185
    %207 = vmatpush.msra.mxu0 %v184
    %208 = vmatpush.msra.mxu0 %v183
    %209 = vmatpush.msra.mxu0 %v182
    %210 = vmatpush.msra.mxu0 %v181
    %211 = vmatpush.msra.mxu0 %v180
    %212 = vmatmul.f32.gmra.mxu0 %v176
    %v213 = vpop.f32.mrf.mxu0
    %v214 = vadd.f32 0.0, %v213
    %215 = vmatmul.f32.gmra.mxu0 %v177
    %v216 = vpop.f32.mrf.mxu0
    %v217 = vadd.f32 0.0, %v216
    %218 = vmatmul.f32.gmra.mxu0 %v178
    %v219 = vpop.f32.mrf.mxu0
    %v220 = vadd.f32 0.0, %v219
    %221 = vmatmul.f32.gmra.mxu0 %v179
    %v222 = vpop.f32.mrf.mxu0
    %v223 = vadd.f32 0.0, %v222
    %224 = vdwg.mxu0
    %v225 = vld [vmem:[%s2] sm:$0x1]
    %v226 = vld [vmem:[%s3] sm:$0x1]
    %v227 = vadd.f32 %v214, %v217
    %v228 = vadd.f32 %v227, %v220
    %v229 = vadd.f32 %v228, %v223
    %v230 = vrot.slane %v229, 4
    %v231 = vadd.f32 %v229, %v230
    %v232 = vrot.slane %v231, 2
    %v233 = vadd.f32 %v231, %v232
    %v234 = vrot.slane %v233, 1
    %v235 = vadd.f32 %v233, %v234
    %v236 = vmul.f32 %v214, %v214
    %v237 = vmul.f32 %v217, %v217
    %v238 = vmul.f32 %v220, %v220
    %v239 = vmul.f32 %v223, %v223
    %v240 = vadd.f32 %v236, %v237
    %v241 = vadd.f32 %v240, %v238
    %v242 = vadd.f32 %v241, %v239
    %v243 = vrot.slane %v242, 4
    %v244 = vadd.f32 %v242, %v243
    %v245 = vrot.slane %v244, 2
    %v246 = vadd.f32 %v244, %v245
    %v247 = vrot.slane %v246, 1
    %v248 = vadd.f32 %v246, %v247
    %v249 = vmul.f32 %v235, 0.03125
    %v250 = vmul.f32 %v248, 0.03125
    %v251 = vmul.f32 %v249, %v249
    %v252 = vsub.f32 %v250, %v251
    %v253 = vmax.f32 %v252, 0.0
    %v254 = vadd.f32 %v253, 1e-05
    %v255 = vrsqrt.pop %v254
    %v256 = vmul.f32 %v255, %v254
    %v257 = vmul.f32 %v256, %v255
    %v258 = vmul.f32 0.5, %v257
    %v259 = vsub.f32 1.5, %v258
    %v260 = vmul.f32 %v255, %v259
    %vm261 = vweird.f32 %v254
    %vm262 = vweird.f32 %v255
    %vm263 = vmor %vm261, %vm262
    %v264 = vsel %vm263, %v255, %v260
    %v265 = vmul.f32 %v264, %v225
    %v266 = vmul.f32 %v249, %v265
    %v267 = vsub.f32 %v226, %v266
    %v268 = vperm.slane %v265, 0
    %v269 = vmul.f32 %v214, %v268
    %v270 = vmul.f32 %v217, %v268
    %v271 = vmul.f32 %v220, %v268
    %v272 = vmul.f32 %v223, %v268
    %v274 = vperm.slane %v267, 0
    %v276 = vadd.f32 %v269, %v274
    %v277 = vadd.f32 %v270, %v274
    %v278 = vadd.f32 %v271, %v274
    %v279 = vadd.f32 %v272, %v274
    %v280 = vmax.f32 %v276, 0.0
    %v281 = vmax.f32 %v277, 0.0
    %v282 = vmax.f32 %v278, 0.0
    %v283 = vmax.f32 %v279, 0.0
    %v284 = vrot.slane %v280, 6
    %v285 = vrot.slane %v281, 6
    %v286 = vrot.slane %v282, 6
    %v287 = vrot.slane %v283, 6
    %vm288 = vcmp.lt.s32.totalorder %v124, 2
    %v289 = vsel %vm288, %v286, %v287
    %v290 = vsel %vm288, %v285, %v286
    %v291 = vsel %vm288, %v284, %v285
    %v292 = vsel %vm288, %v287, %v284
    %v293 = vadd.s32 %v172, 4294967294
    %v294 = vadd.s32 %v173, 4294967294
    %v295 = vadd.s32 %v174, 4294967294
    %v296 = vadd.s32 %v175, 4294967294
    %vm297 = vcmp.ge.s32.totalorder %v293, 0
    %vm298 = vcmp.ge.s32.totalorder %v294, 0
    %vm299 = vcmp.ge.s32.totalorder %v295, 0
    %vm300 = vcmp.ge.s32.totalorder %v296, 0
    %vm301 = vcmp.lt.s32.totalorder %v293, 16
    %vm302 = vcmp.lt.s32.totalorder %v294, 16
    %vm303 = vcmp.lt.s32.totalorder %v295, 16
    %vm304 = vcmp.lt.s32.totalorder %v296, 16
    %vm305 = vmand %vm297, %vm301
    %vm306 = vmand %vm298, %vm302
    %vm307 = vmand %vm299, %vm303
    %vm308 = vmand %vm300, %vm304
    %v309 = vsel %vm305, 1, 0
    %v310 = vsel %vm306, 1, 0
    %v311 = vsel %vm307, 1, 0
    %v312 = vsel %vm308, 1, 0
    %vm313 = vcmp.eq.s32.totalorder %v309, 1
    %vm314 = vcmp.eq.s32.totalorder %v310, 1
    %vm315 = vcmp.eq.s32.totalorder %v311, 1
    %vm316 = vcmp.eq.s32.totalorder %v312, 1
    %v317 = vsel %vm313, %v292, 0.0
    %v318 = vsel %vm314, %v291, 0.0
    %v319 = vsel %vm315, %v290, 0.0
    %v320 = vsel %vm316, %v289, 0.0
    %v321 = vrot.slane %v280, 7
    %v322 = vrot.slane %v281, 7
    %v323 = vrot.slane %v282, 7
    %v324 = vrot.slane %v283, 7
    %vm325 = vcmp.lt.s32.totalorder %v124, 1
    %v326 = vsel %vm325, %v323, %v324
    %v327 = vsel %vm325, %v322, %v323
    %v328 = vsel %vm325, %v321, %v322
    %v329 = vsel %vm325, %v324, %v321
    %v330 = vadd.s32 %v172, 4294967295
    %v331 = vadd.s32 %v173, 4294967295
    %v332 = vadd.s32 %v174, 4294967295
    %v333 = vadd.s32 %v175, 4294967295
    %vm334 = vcmp.ge.s32.totalorder %v330, 0
    %vm335 = vcmp.ge.s32.totalorder %v331, 0
    %vm336 = vcmp.ge.s32.totalorder %v332, 0
    %vm337 = vcmp.ge.s32.totalorder %v333, 0
    %vm338 = vcmp.lt.s32.totalorder %v330, 16
    %vm339 = vcmp.lt.s32.totalorder %v331, 16
    %vm340 = vcmp.lt.s32.totalorder %v332, 16
    %vm341 = vcmp.lt.s32.totalorder %v333, 16
    %vm342 = vmand %vm334, %vm338
    %vm343 = vmand %vm335, %vm339
    %vm344 = vmand %vm336, %vm340
    %vm345 = vmand %vm337, %vm341
    %v346 = vsel %vm342, 1, 0
    %v347 = vsel %vm343, 1, 0
    %v348 = vsel %vm344, 1, 0
    %v349 = vsel %vm345, 1, 0
    %vm350 = vcmp.eq.s32.totalorder %v346, 1
    %vm351 = vcmp.eq.s32.totalorder %v347, 1
    %vm352 = vcmp.eq.s32.totalorder %v348, 1
    %vm353 = vcmp.eq.s32.totalorder %v349, 1
    %v354 = vsel %vm350, %v329, 0.0
    %v355 = vsel %vm351, %v328, 0.0
    %v356 = vsel %vm352, %v327, 0.0
    %v357 = vsel %vm353, %v326, 0.0
    %358 = vrot.lane.b32.xlu0 %v354, 8
    %v359 = vpop.permute.xlu0 %358
    %360 = vrot.lane.b32.xlu0 %v355, 8
    %v361 = vpop.permute.xlu0 %360
    %362 = vrot.lane.b32.xlu0 %v356, 8
    %v363 = vpop.permute.xlu0 %362
    %364 = vrot.lane.b32.xlu0 %v357, 8
    %v365 = vpop.permute.xlu0 %364
    %v366 = vadd.f32 %v317, %v359
    %v367 = vadd.f32 %v318, %v361
    %v368 = vadd.f32 %v319, %v363
    %v369 = vadd.f32 %v320, %v365
    %370 = vrot.lane.b32.xlu0 %v280, 16
    %v371 = vpop.permute.xlu0 %370
    %372 = vrot.lane.b32.xlu0 %v281, 16
    %v373 = vpop.permute.xlu0 %372
    %374 = vrot.lane.b32.xlu0 %v282, 16
    %v375 = vpop.permute.xlu0 %374
    %376 = vrot.lane.b32.xlu0 %v283, 16
    %v377 = vpop.permute.xlu0 %376
    %v378 = vadd.f32 %v366, %v371
    %v379 = vadd.f32 %v367, %v373
    %v380 = vadd.f32 %v368, %v375
    %v381 = vadd.f32 %v369, %v377
    %v382 = vrot.slane %v280, 1
    %v383 = vrot.slane %v281, 1
    %v384 = vrot.slane %v282, 1
    %v385 = vrot.slane %v283, 1
    %vm386 = vcmp.lt.s32.totalorder %v124, 7
    %v387 = vsel %vm386, %v384, %v385
    %v388 = vsel %vm386, %v383, %v384
    %v389 = vsel %vm386, %v382, %v383
    %v390 = vsel %vm386, %v385, %v382
    %v391 = vadd.s32 %v172, 1
    %v392 = vadd.s32 %v173, 1
    %v393 = vadd.s32 %v174, 1
    %v394 = vadd.s32 %v175, 1
    %vm395 = vcmp.ge.s32.totalorder %v391, 0
    %vm396 = vcmp.ge.s32.totalorder %v392, 0
    %vm397 = vcmp.ge.s32.totalorder %v393, 0
    %vm398 = vcmp.ge.s32.totalorder %v394, 0
    %vm399 = vcmp.lt.s32.totalorder %v391, 16
    %vm400 = vcmp.lt.s32.totalorder %v392, 16
    %vm401 = vcmp.lt.s32.totalorder %v393, 16
    %vm402 = vcmp.lt.s32.totalorder %v394, 16
    %vm403 = vmand %vm395, %vm399
    %vm404 = vmand %vm396, %vm400
    %vm405 = vmand %vm397, %vm401
    %vm406 = vmand %vm398, %vm402
    %v407 = vsel %vm403, 1, 0
    %v408 = vsel %vm404, 1, 0
    %v409 = vsel %vm405, 1, 0
    %v410 = vsel %vm406, 1, 0
    %vm411 = vcmp.eq.s32.totalorder %v407, 1
    %vm412 = vcmp.eq.s32.totalorder %v408, 1
    %vm413 = vcmp.eq.s32.totalorder %v409, 1
    %vm414 = vcmp.eq.s32.totalorder %v410, 1
    %v415 = vsel %vm411, %v389, 0.0
    %v416 = vsel %vm412, %v388, 0.0
    %v417 = vsel %vm413, %v387, 0.0
    %v418 = vsel %vm414, %v390, 0.0
    %419 = vrot.lane.b32.xlu0 %v415, 24
    %v420 = vpop.permute.xlu0 %419
    %421 = vrot.lane.b32.xlu0 %v416, 24
    %v422 = vpop.permute.xlu0 %421
    %423 = vrot.lane.b32.xlu0 %v417, 24
    %v424 = vpop.permute.xlu0 %423
    %425 = vrot.lane.b32.xlu0 %v418, 24
    %v426 = vpop.permute.xlu0 %425
    %v427 = vadd.f32 %v378, %v420
    %v428 = vadd.f32 %v379, %v422
    %v429 = vadd.f32 %v380, %v424
    %v430 = vadd.f32 %v381, %v426
    %v431 = vrot.slane %v280, 2
    %v432 = vrot.slane %v281, 2
    %v433 = vrot.slane %v282, 2
    %v434 = vrot.slane %v283, 2
    %vm435 = vcmp.lt.s32.totalorder %v124, 6
    %v436 = vsel %vm435, %v433, %v434
    %v437 = vsel %vm435, %v432, %v433
    %v438 = vsel %vm435, %v431, %v432
    %v439 = vsel %vm435, %v434, %v431
    %v440 = vadd.s32 %v172, 2
    %v441 = vadd.s32 %v173, 2
    %v442 = vadd.s32 %v174, 2
    %v443 = vadd.s32 %v175, 2
    %vm444 = vcmp.ge.s32.totalorder %v440, 0
    %vm445 = vcmp.ge.s32.totalorder %v441, 0
    %vm446 = vcmp.ge.s32.totalorder %v442, 0
    %vm447 = vcmp.ge.s32.totalorder %v443, 0
    %vm448 = vcmp.lt.s32.totalorder %v440, 16
    %vm449 = vcmp.lt.s32.totalorder %v441, 16
    %vm450 = vcmp.lt.s32.totalorder %v442, 16
    %vm451 = vcmp.lt.s32.totalorder %v443, 16
    %vm452 = vmand %vm444, %vm448
    %vm453 = vmand %vm445, %vm449
    %vm454 = vmand %vm446, %vm450
    %vm455 = vmand %vm447, %vm451
    %v456 = vsel %vm452, 1, 0
    %v457 = vsel %vm453, 1, 0
    %v458 = vsel %vm454, 1, 0
    %v459 = vsel %vm455, 1, 0
    %vm460 = vcmp.eq.s32.totalorder %v456, 1
    %vm461 = vcmp.eq.s32.totalorder %v457, 1
    %vm462 = vcmp.eq.s32.totalorder %v458, 1
    %vm463 = vcmp.eq.s32.totalorder %v459, 1
    %v464 = vsel %vm460, %v438, 0.0
    %v465 = vsel %vm461, %v437, 0.0
    %v466 = vsel %vm462, %v436, 0.0
    %v467 = vsel %vm463, %v439, 0.0
    %468 = vrot.lane.b32.xlu0 %v464, 32
    %v469 = vpop.permute.xlu0 %468
    %470 = vrot.lane.b32.xlu0 %v465, 32
    %v471 = vpop.permute.xlu0 %470
    %472 = vrot.lane.b32.xlu0 %v466, 32
    %v473 = vpop.permute.xlu0 %472
    %474 = vrot.lane.b32.xlu0 %v467, 32
    %v475 = vpop.permute.xlu0 %474
    %v476 = vadd.f32 %v427, %v469
    %v477 = vadd.f32 %v428, %v471
    %v478 = vadd.f32 %v429, %v473
    %v479 = vadd.f32 %v430, %v475
    %v480 = vld [vmem:[#allocation7] sm:$0xff]
    %v481 = vld [vmem:[#allocation7 + $0x8] sm:$0xff]
    %v482 = vld [vmem:[#allocation7 + $0x10] sm:$0xff]
    %v483 = vld [vmem:[#allocation7 + $0x18] sm:$0xff]
    %v484 = vld [vmem:[#allocation7 + $0x20] sm:$0xff]
    %v485 = vld [vmem:[#allocation7 + $0x28] sm:$0xff]
    %v486 = vld [vmem:[#allocation7 + $0x30] sm:$0xff]
    %v487 = vld [vmem:[#allocation7 + $0x38] sm:$0xff]
    %v488 = vld [vmem:[#allocation7 + $0x40] sm:$0xff]
    %v489 = vld [vmem:[#allocation7 + $0x48] sm:$0xff]
    %v490 = vld [vmem:[#allocation7 + $0x50] sm:$0xff]
    %v491 = vld [vmem:[#allocation7 + $0x58] sm:$0xff]
    %v492 = vld [vmem:[#allocation7 + $0x60] sm:$0xff]
    %v493 = vld [vmem:[#allocation7 + $0x68] sm:$0xff]
    %v494 = vld [vmem:[#allocation7 + $0x70] sm:$0xff]
    %v495 = vld [vmem:[#allocation7 + $0x78] sm:$0xff]
    %496 = vmatpush.msra.mxu0 %v495
    %497 = vmatpush.msra.mxu0 %v494
    %498 = vmatpush.msra.mxu0 %v493
    %499 = vmatpush.msra.mxu0 %v492
    %500 = vmatpush.msra.mxu0 %v491
    %501 = vmatpush.msra.mxu0 %v490
    %502 = vmatpush.msra.mxu0 %v489
    %503 = vmatpush.msra.mxu0 %v488
    %504 = vmatpush.msra.mxu0 %v487
    %505 = vmatpush.msra.mxu0 %v486
    %506 = vmatpush.msra.mxu0 %v485
    %507 = vmatpush.msra.mxu0 %v484
    %508 = vmatpush.msra.mxu0 %v483
    %509 = vmatpush.msra.mxu0 %v482
    %510 = vmatpush.msra.mxu0 %v481
    %511 = vmatpush.msra.mxu0 %v480
    %512 = vmatmul.f32.gmra.mxu0 %v476
    %v513 = vpop.f32.mrf.mxu0
    %v514 = vadd.f32 0.0, %v513
    %515 = vmatmul.f32.gmra.mxu0 %v477
    %v516 = vpop.f32.mrf.mxu0
    %v517 = vadd.f32 0.0, %v516
    %518 = vmatmul.f32.gmra.mxu0 %v478
    %v519 = vpop.f32.mrf.mxu0
    %v520 = vadd.f32 0.0, %v519
    %521 = vmatmul.f32.gmra.mxu0 %v479
    %v522 = vpop.f32.mrf.mxu0
    %v523 = vadd.f32 0.0, %v522
    %524 = vdwg.mxu0
    %v525 = vld [vmem:[%s5] sm:$0x1]
    %v526 = vld [vmem:[%s6] sm:$0x1]
    %v527 = vadd.f32 %v514, %v517
    %v528 = vadd.f32 %v527, %v520
    %v529 = vadd.f32 %v528, %v523
    %v530 = vrot.slane %v529, 4
    %v531 = vadd.f32 %v529, %v530
    %v532 = vrot.slane %v531, 2
    %v533 = vadd.f32 %v531, %v532
    %v534 = vrot.slane %v533, 1
    %v535 = vadd.f32 %v533, %v534
    %v536 = vmul.f32 %v514, %v514
    %v537 = vmul.f32 %v517, %v517
    %v538 = vmul.f32 %v520, %v520
    %v539 = vmul.f32 %v523, %v523
    %v540 = vadd.f32 %v536, %v537
    %v541 = vadd.f32 %v540, %v538
    %v542 = vadd.f32 %v541, %v539
    %v543 = vrot.slane %v542, 4
    %v544 = vadd.f32 %v542, %v543
    %v545 = vrot.slane %v544, 2
    %v546 = vadd.f32 %v544, %v545
    %v547 = vrot.slane %v546, 1
    %v548 = vadd.f32 %v546, %v547
    %v549 = vmul.f32 %v535, 0.03125
    %v550 = vmul.f32 %v548, 0.03125
    %v551 = vmul.f32 %v549, %v549
    %v552 = vsub.f32 %v550, %v551
    %v553 = vmax.f32 %v552, 0.0
    %v554 = vadd.f32 %v553, 1e-05
    %v555 = vrsqrt.pop %v554
    %v556 = vmul.f32 %v555, %v554
    %v557 = vmul.f32 %v556, %v555
    %v558 = vmul.f32 0.5, %v557
    %v559 = vsub.f32 1.5, %v558
    %v560 = vmul.f32 %v555, %v559
    %vm561 = vweird.f32 %v554
    %vm562 = vweird.f32 %v555
    %vm563 = vmor %vm561, %vm562
    %v564 = vsel %vm563, %v555, %v560
    %v565 = vmul.f32 %v564, %v525
    %v566 = vmul.f32 %v549, %v565
    %v567 = vsub.f32 %v526, %v566
    %v568 = vperm.slane %v565, 0
    %v569 = vmul.f32 %v514, %v568
    %v570 = vmul.f32 %v517, %v568
    %v571 = vmul.f32 %v520, %v568
    %v572 = vmul.f32 %v523, %v568
    %v574 = vperm.slane %v567, 0
    %v576 = vadd.f32 %v569, %v574
    %v577 = vadd.f32 %v570, %v574
    %v578 = vadd.f32 %v571, %v574
    %v579 = vadd.f32 %v572, %v574
    %v580 = vmax.f32 %v576, 0.0
    %v581 = vmax.f32 %v577, 0.0
    %v582 = vmax.f32 %v578, 0.0
    %v583 = vmax.f32 %v579, 0.0
    %v584 = vrot.slane %v580, 7
    %v585 = vrot.slane %v581, 7
    %v586 = vrot.slane %v582, 7
    %v587 = vrot.slane %v583, 7
    %v588 = vsel %vm325, %v586, %v587
    %v589 = vsel %vm325, %v585, %v586
    %v590 = vsel %vm325, %v584, %v585
    %v591 = vsel %vm325, %v587, %v584
    %v592 = vsel %vm350, %v591, 0.0
    %v593 = vsel %vm351, %v590, 0.0
    %v594 = vsel %vm352, %v589, 0.0
    %v595 = vsel %vm353, %v588, 0.0
    %596 = vrot.lane.b32.xlu0 %v580, 8
    %v597 = vpop.permute.xlu0 %596
    %598 = vrot.lane.b32.xlu0 %v581, 8
    %v599 = vpop.permute.xlu0 %598
    %600 = vrot.lane.b32.xlu0 %v582, 8
    %v601 = vpop.permute.xlu0 %600
    %602 = vrot.lane.b32.xlu0 %v583, 8
    %v603 = vpop.permute.xlu0 %602
    %v604 = vadd.f32 %v592, %v597
    %v605 = vadd.f32 %v593, %v599
    %v606 = vadd.f32 %v594, %v601
    %v607 = vadd.f32 %v595, %v603
    %v608 = vrot.slane %v580, 1
    %v609 = vrot.slane %v581, 1
    %v610 = vrot.slane %v582, 1
    %v611 = vrot.slane %v583, 1
    %v612 = vsel %vm386, %v610, %v611
    %v613 = vsel %vm386, %v609, %v610
    %v614 = vsel %vm386, %v608, %v609
    %v615 = vsel %vm386, %v611, %v608
    %v616 = vsel %vm411, %v614, 0.0
    %v617 = vsel %vm412, %v613, 0.0
    %v618 = vsel %vm413, %v612, 0.0
    %v619 = vsel %vm414, %v615, 0.0
    %620 = vrot.lane.b32.xlu0 %v616, 16
    %v621 = vpop.permute.xlu0 %620
    %622 = vrot.lane.b32.xlu0 %v617, 16
    %v623 = vpop.permute.xlu0 %622
    %624 = vrot.lane.b32.xlu0 %v618, 16
    %v625 = vpop.permute.xlu0 %624
    %626 = vrot.lane.b32.xlu0 %v619, 16
    %v627 = vpop.permute.xlu0 %626
    %v628 = vadd.f32 %v604, %v621
    %v629 = vadd.f32 %v605, %v623
    %v630 = vadd.f32 %v606, %v625
    %v631 = vadd.f32 %v607, %v627
    %v632 = vld [vmem:[#allocation8] sm:$0xff]
    %v633 = vld [vmem:[#allocation8 + $0x8] sm:$0xff]
    %v634 = vld [vmem:[#allocation8 + $0x10] sm:$0xff]
    %v635 = vld [vmem:[#allocation8 + $0x18] sm:$0xff]
    %v636 = vld [vmem:[#allocation8 + $0x20] sm:$0xff]
    %v637 = vld [vmem:[#allocation8 + $0x28] sm:$0xff]
    %v638 = vld [vmem:[#allocation8 + $0x30] sm:$0xff]
    %v639 = vld [vmem:[#allocation8 + $0x38] sm:$0xff]
    %v640 = vld [vmem:[#allocation8 + $0x40] sm:$0xff]
    %v641 = vld [vmem:[#allocation8 + $0x48] sm:$0xff]
    %v642 = vld [vmem:[#allocation8 + $0x50] sm:$0xff]
    %v643 = vld [vmem:[#allocation8 + $0x58] sm:$0xff]
    %v644 = vld [vmem:[#allocation8 + $0x60] sm:$0xff]
    %v645 = vld [vmem:[#allocation8 + $0x68] sm:$0xff]
    %v646 = vld [vmem:[#allocation8 + $0x70] sm:$0xff]
    %v647 = vld [vmem:[#allocation8 + $0x78] sm:$0xff]
    %648 = vmatpush.msra.mxu0 %v647
    %649 = vmatpush.msra.mxu0 %v646
    %650 = vmatpush.msra.mxu0 %v645
    %651 = vmatpush.msra.mxu0 %v644
    %652 = vmatpush.msra.mxu0 %v643
    %653 = vmatpush.msra.mxu0 %v642
    %654 = vmatpush.msra.mxu0 %v641
    %655 = vmatpush.msra.mxu0 %v640
    %656 = vmatpush.msra.mxu0 %v639
    %657 = vmatpush.msra.mxu0 %v638
    %658 = vmatpush.msra.mxu0 %v637
    %659 = vmatpush.msra.mxu0 %v636
    %660 = vmatpush.msra.mxu0 %v635
    %661 = vmatpush.msra.mxu0 %v634
    %662 = vmatpush.msra.mxu0 %v633
    %663 = vmatpush.msra.mxu0 %v632
    %664 = vmatmul.f32.gmra.mxu0 %v628
    %v665 = vpop.f32.mrf.mxu0
    %v666 = vadd.f32 0.0, %v665
    %667 = vmatmul.f32.gmra.mxu0 %v629
    %v668 = vpop.f32.mrf.mxu0
    %v669 = vadd.f32 0.0, %v668
    %670 = vmatmul.f32.gmra.mxu0 %v630
    %v671 = vpop.f32.mrf.mxu0
    %v672 = vadd.f32 0.0, %v671
    %673 = vmatmul.f32.gmra.mxu0 %v631
    %v674 = vpop.f32.mrf.mxu0
    %v675 = vadd.f32 0.0, %v674
    %676 = vdwg.mxu0
    %v677 = vld [vmem:[%s8] sm:$0x1]
    %v678 = vld [vmem:[%s9] sm:$0x1]
    %v679 = vadd.f32 %v666, %v669
    %v680 = vadd.f32 %v679, %v672
    %v681 = vadd.f32 %v680, %v675
    %v682 = vrot.slane %v681, 4
    %v683 = vadd.f32 %v681, %v682
    %v684 = vrot.slane %v683, 2
    %v685 = vadd.f32 %v683, %v684
    %v686 = vrot.slane %v685, 1
    %v687 = vadd.f32 %v685, %v686
    %v688 = vmul.f32 %v666, %v666
    %v689 = vmul.f32 %v669, %v669
    %v690 = vmul.f32 %v672, %v672
    %v691 = vmul.f32 %v675, %v675
    %v692 = vadd.f32 %v688, %v689
    %v693 = vadd.f32 %v692, %v690
    %v694 = vadd.f32 %v693, %v691
    %v695 = vrot.slane %v694, 4
    %v696 = vadd.f32 %v694, %v695
    %v697 = vrot.slane %v696, 2
    %v698 = vadd.f32 %v696, %v697
    %v699 = vrot.slane %v698, 1
    %v700 = vadd.f32 %v698, %v699
    %v701 = vmul.f32 %v687, 0.03125
    %v702 = vmul.f32 %v700, 0.03125
    %v703 = vmul.f32 %v701, %v701
    %v704 = vsub.f32 %v702, %v703
    %v705 = vmax.f32 %v704, 0.0
    %v706 = vadd.f32 %v705, 1e-05
    %v707 = vrsqrt.pop %v706
    %v708 = vmul.f32 %v707, %v706
    %v709 = vmul.f32 %v708, %v707
    %v710 = vmul.f32 0.5, %v709
    %v711 = vsub.f32 1.5, %v710
    %v712 = vmul.f32 %v707, %v711
    %vm713 = vweird.f32 %v706
    %vm714 = vweird.f32 %v707
    %vm715 = vmor %vm713, %vm714
    %v716 = vsel %vm715, %v707, %v712
    %v717 = vmul.f32 %v716, %v677
    %v718 = vmul.f32 %v701, %v717
    %v719 = vsub.f32 %v678, %v718
    %v720 = vperm.slane %v717, 0
    %v721 = vmul.f32 %v666, %v720
    %v722 = vmul.f32 %v669, %v720
    %v723 = vmul.f32 %v672, %v720
    %v724 = vmul.f32 %v675, %v720
    %v726 = vperm.slane %v719, 0
    %v728 = vadd.f32 %v721, %v726
    %v729 = vadd.f32 %v722, %v726
    %v730 = vadd.f32 %v723, %v726
    %v731 = vadd.f32 %v724, %v726
    %v732 = vld [vmem:[#allocation10] sm:$0xff]
    %v733 = vld [vmem:[#allocation10 + $0x8] sm:$0xff]
    %v734 = vld [vmem:[#allocation10 + $0x10] sm:$0xff]
    %v735 = vld [vmem:[#allocation10 + $0x18] sm:$0xff]
    %v736 = vld [vmem:[#allocation10 + $0x20] sm:$0xff]
    %v737 = vld [vmem:[#allocation10 + $0x28] sm:$0xff]
    %v738 = vld [vmem:[#allocation10 + $0x30] sm:$0xff]
    %v739 = vld [vmem:[#allocation10 + $0x38] sm:$0xff]
    %v740 = vld [vmem:[#allocation10 + $0x40] sm:$0xff]
    %v741 = vld [vmem:[#allocation10 + $0x48] sm:$0xff]
    %v742 = vld [vmem:[#allocation10 + $0x50] sm:$0xff]
    %v743 = vld [vmem:[#allocation10 + $0x58] sm:$0xff]
    %v744 = vld [vmem:[#allocation10 + $0x60] sm:$0xff]
    %v745 = vld [vmem:[#allocation10 + $0x68] sm:$0xff]
    %v746 = vld [vmem:[#allocation10 + $0x70] sm:$0xff]
    %v747 = vld [vmem:[#allocation10 + $0x78] sm:$0xff]
    %748 = vmatpush.msra.mxu0 %v747
    %749 = vmatpush.msra.mxu0 %v746
    %750 = vmatpush.msra.mxu0 %v745
    %751 = vmatpush.msra.mxu0 %v744
    %752 = vmatpush.msra.mxu0 %v743
    %753 = vmatpush.msra.mxu0 %v742
    %754 = vmatpush.msra.mxu0 %v741
    %755 = vmatpush.msra.mxu0 %v740
    %756 = vmatpush.msra.mxu0 %v739
    %757 = vmatpush.msra.mxu0 %v738
    %758 = vmatpush.msra.mxu0 %v737
    %759 = vmatpush.msra.mxu0 %v736
    %760 = vmatpush.msra.mxu0 %v735
    %761 = vmatpush.msra.mxu0 %v734
    %762 = vmatpush.msra.mxu0 %v733
    %763 = vmatpush.msra.mxu0 %v732
    %764 = vmatmul.f32.gmra.mxu0 %v176
    %v765 = vpop.f32.mrf.mxu0
    %v766 = vadd.f32 0.0, %v765
    %767 = vmatmul.f32.gmra.mxu0 %v177
    %v768 = vpop.f32.mrf.mxu0
    %v769 = vadd.f32 0.0, %v768
    %770 = vmatmul.f32.gmra.mxu0 %v178
    %v771 = vpop.f32.mrf.mxu0
    %v772 = vadd.f32 0.0, %v771
    %773 = vmatmul.f32.gmra.mxu0 %v179
    %v774 = vpop.f32.mrf.mxu0
    %v775 = vadd.f32 0.0, %v774
    %776 = vdwg.mxu0
    %v777 = vld [vmem:[%s11] sm:$0x1]
    %v778 = vld [vmem:[%s12] sm:$0x1]
    %v779 = vadd.f32 %v766, %v769
    %v780 = vadd.f32 %v779, %v772
    %v781 = vadd.f32 %v780, %v775
    %v782 = vrot.slane %v781, 4
    %v783 = vadd.f32 %v781, %v782
    %v784 = vrot.slane %v783, 2
    %v785 = vadd.f32 %v783, %v784
    %v786 = vrot.slane %v785, 1
    %v787 = vadd.f32 %v785, %v786
    %v788 = vmul.f32 %v766, %v766
    %v789 = vmul.f32 %v769, %v769
    %v790 = vmul.f32 %v772, %v772
    %v791 = vmul.f32 %v775, %v775
    %v792 = vadd.f32 %v788, %v789
    %v793 = vadd.f32 %v792, %v790
    %v794 = vadd.f32 %v793, %v791
    %v795 = vrot.slane %v794, 4
    %v796 = vadd.f32 %v794, %v795
    %v797 = vrot.slane %v796, 2
    %v798 = vadd.f32 %v796, %v797
    %v799 = vrot.slane %v798, 1
    %v800 = vadd.f32 %v798, %v799
    %v801 = vmul.f32 %v787, 0.03125
    %v802 = vmul.f32 %v800, 0.03125
    %v803 = vmul.f32 %v801, %v801
    %v804 = vsub.f32 %v802, %v803
    %v805 = vmax.f32 %v804, 0.0
    %v806 = vadd.f32 %v805, 1e-05
    %v807 = vrsqrt.pop %v806
    %v808 = vmul.f32 %v807, %v806
    %v809 = vmul.f32 %v808, %v807
    %v810 = vmul.f32 0.5, %v809
    %v811 = vsub.f32 1.5, %v810
    %v812 = vmul.f32 %v807, %v811
    %vm813 = vweird.f32 %v806
    %vm814 = vweird.f32 %v807
    %vm815 = vmor %vm813, %vm814
    %v816 = vsel %vm815, %v807, %v812
    %v817 = vmul.f32 %v816, %v777
    %v818 = vmul.f32 %v801, %v817
    %v819 = vsub.f32 %v778, %v818
    %v820 = vperm.slane %v817, 0
    %v821 = vmul.f32 %v766, %v820
    %v822 = vmul.f32 %v769, %v820
    %v823 = vmul.f32 %v772, %v820
    %v824 = vmul.f32 %v775, %v820
    %v826 = vperm.slane %v819, 0
    %v828 = vadd.f32 %v821, %v826
    %v829 = vadd.f32 %v822, %v826
    %v830 = vadd.f32 %v823, %v826
    %v831 = vadd.f32 %v824, %v826
    %v832 = vadd.f32 %v728, %v828
    %v833 = vadd.f32 %v729, %v829
    %v834 = vadd.f32 %v730, %v830
    %v835 = vadd.f32 %v731, %v831
    %v836 = vmax.f32 %v832, 0.0
    %v837 = vmax.f32 %v833, 0.0
    %v838 = vmax.f32 %v834, 0.0
    %v839 = vmax.f32 %v835, 0.0
    %840 = vst [vmem:[#allocation11] sm:$0xff] %v836
    %841 = vst [vmem:[#allocation11 + $0x8] sm:$0xff] %v837
    %842 = vst [vmem:[#allocation11 + $0x10] sm:$0xff] %v838
    %843 = vst [vmem:[#allocation11 + $0x18] sm:$0xff] %v839
    // Predicated region
    $region74: #{tpu_custom_call.1} parent=1 // pred_check
      _
    $region75: #{tpu_custom_call.1} parent=1 // pred_check_branch
      %845 = sbr.rel (0) target = $region77
    $region76: #{tpu_custom_call.1} parent=1 // pred_region
      %847 = vsyncadd [#allocation4], 0
      %s848 = sshll.u32 [#allocation11], 4
      %s849 = int_to_ptr.vmem [resolvable:$true] %s848
      %s850 = sshll.u32 %s13, 4
      %s851 = int_to_ptr.hbm [resolvable:$true] %s850
      %856 = dma.vmem_to_hbm [thread:$0]  %s849, 512, %s851, [#allocation4], 128, 128, 8
    $region77: #{tpu_custom_call.1} parent=1 // pred_fallthru
      _
    // Predicated region
    $region78: #{tpu_custom_call.1} parent=1 // pred_check
      _
    $region79: #{tpu_custom_call.1} parent=1 // pred_check_branch
      %858 = sbr.rel (0) target = $region81
    $region80: #{tpu_custom_call.1} parent=1 // pred_region
      %860 = dma.done [#allocation4], 512
    $region81: #{tpu_custom_call.1} parent=1 // pred_fallthru
      _
    %861 = vsyncpa [#allocation3], 1
    %862 = vsyncpa [#allocation6], 1
    %863 = vsyncpa [#allocation9], 1
    %864 = vsyncpa [#allocation4], 1

</llo_original>
